<compile_context>
chip_gen: v6e
topology: v6e:2x2x1
jax: 0.10.0
libtpu: 0.0.40
codegen_flags: <defaults>
</compile_context>

<pallas_src>
import math
import functools

import jax
import jax.numpy as jnp
from jax import lax
from jax.experimental import pallas as pl
from jax.experimental.pallas import tpu as pltpu


def _round_up(n, m):
    return ((n + m - 1) // m) * m


def _cdiv(a, b):
    return (a + b - 1) // b


def projection_head_kernel(x_ref, w1_ref, w2_ref, p_ref, o_ref, *,
                           eps, p_valid, approximate_gelu):
    x = x_ref[...]                               # [tb, E], native dtype
    w1 = w1_ref[...]                             # [E, Pp], native dtype
    w2 = w2_ref[...]                             # [Pp, Pp], native dtype

    # Packed per-channel vectors, read straight from the ref (already f32).
    b1 = p_ref[0:1, :]
    b2 = p_ref[1:2, :]
    gamma = p_ref[2:3, :]
    beta = p_ref[3:4, :]

    # Linear 1 (projection): native-dtype MXU matmul, f32 accumulate.
    projected = jnp.dot(x, w1, preferred_element_type=jnp.float32) + b1

    # GELU: exact erf by default (matches nn.GELU()); tanh variant uses EUP.
    if approximate_gelu:
        h = jax.nn.gelu(projected, approximate=True)
    else:
        h = 0.5 * projected * (1.0 + lax.erf(projected * (1.0 / math.sqrt(2.0))))

    # Linear 2 (fc): feed the MXU in the weight dtype, f32 accumulate.
    h = jnp.dot(h.astype(w2.dtype), w2, preferred_element_type=jnp.float32) + b2

    # Dropout: inference-mode identity.
    # TODO(synk): training-mode dropout would use pltpu.prng_seed + stateful_bernoulli.

    # Skip connection.
    h = h + projected

    # LayerNorm over the true P channels (handles lane-padded Pp > P).
    pp = h.shape[-1]
    if pp == p_valid:
        mean = jnp.mean(h, axis=-1, keepdims=True)
        centered = h - mean
        var = jnp.mean(centered * centered, axis=-1, keepdims=True)
    else:
        inv_p = 1.0 / float(p_valid)
        mean = jnp.sum(h, axis=-1, keepdims=True) * inv_p   # padded cols are 0
        col = lax.broadcasted_iota(jnp.int32, h.shape, 1)
        centered = jnp.where(col < p_valid, h - mean, 0.0)
        var = jnp.sum(centered * centered, axis=-1, keepdims=True) * inv_p

    inv = lax.rsqrt(var + eps)
    o_ref[...] = (centered * inv * gamma + beta).astype(o_ref.dtype)


def _vmem_budget_bytes():
    """75% of physical VMEM (headroom for compiler scratch), capped at 100 MiB.
    Falls back to a v7x-safe 48 MiB if the query is unavailable."""
    cap = 64 * 1024 * 1024
    try:
        info = pltpu.get_tpu_info()
        cap = int(getattr(info, "vmem_capacity_bytes", cap))
    except Exception:
        pass
    return min(cap * 3 // 4, 100 * 1024 * 1024)


def _estimate_vmem(tb, E, Pp, x_item, w_item, o_item):
    x_buf = 2 * tb * E * x_item                      # double-buffered x tile
    o_buf = 2 * tb * Pp * o_item                     # double-buffered out tile
    wts = (E * Pp + Pp * Pp) * w_item + 4 * Pp * 4   # single-buffered residents
    tmps = 4 * tb * Pp * 4 + tb * E * 4              # f32 intermediates (rough)
    return x_buf + o_buf + wts + tmps


def projection_head(x, w1, b1, w2, b2, gamma, beta, *, eps=1e-5, tb=None,
                    matmul_dtype=None, approximate_gelu=False):
    """x: [B, E]; w1: [E, P]; w2: [P, P]; b1/b2/gamma/beta: [P] or [1, P].
    Returns [B, P] in x's original dtype."""
    B, E = x.shape
    P = w1.shape[1]
    out_dtype = x.dtype

    # Optional low-precision MXU feed (accumulation stays f32 in-kernel).
    if matmul_dtype is not None:
        x = x.astype(matmul_dtype)
        w1 = w1.astype(matmul_dtype)
        w2 = w2.astype(matmul_dtype)

    # Lane-dense guard: pad the projection dim to a multiple of 128 so output
    # stores are full-width vst (sub-128 last dims cause masked partial stores).
    Pp = _round_up(P, 128)
    b1 = b1.reshape(1, P).astype(jnp.float32)
    b2 = b2.reshape(1, P).astype(jnp.float32)
    gamma = gamma.reshape(1, P).astype(jnp.float32)
    beta = beta.reshape(1, P).astype(jnp.float32)
    if Pp != P:
        pad_cols = ((0, 0), (0, Pp - P))
        w1 = jnp.pad(w1, pad_cols)
        w2 = jnp.pad(w2, ((0, Pp - P), (0, Pp - P)))
        b1 = jnp.pad(b1, pad_cols)
        b2 = jnp.pad(b2, pad_cols)
        gamma = jnp.pad(gamma, pad_cols)
        beta = jnp.pad(beta, pad_cols)
    params = jnp.concatenate([b1, b2, gamma, beta], axis=0)   # [4, Pp] f32

    budget = _vmem_budget_bytes()

    # Batch tile: derive from the tile count so ragged batches pad < 8 rows and
    # the grid has >=2 steps (megacore sharding) whenever B > 8.
    if tb is None:
        target = 512 if budget >= 80 * 1024 * 1024 else 256
        n_tiles = _cdiv(B, target)
        if B > 8:
            n_tiles = max(n_tiles, 2)
        tb = _round_up(_cdiv(B, n_tiles), 8)
    tb = max(8, _round_up(tb, 8))

    x_item = x.dtype.itemsize
    w_item = w1.dtype.itemsize
    o_item = jnp.dtype(out_dtype).itemsize
    while tb > 8 and _estimate_vmem(tb, E, Pp, x_item, w_item, o_item) > budget:
        tb = max(8, _round_up(tb // 2, 8))

    Bp = _round_up(B, tb)
    if Bp != B:
        x = jnp.pad(x, ((0, Bp - B), (0, 0)))
    grid = (Bp // tb,)

    cost = pl.CostEstimate(
        flops=2 * Bp * (E * Pp + Pp * Pp),
        transcendentals=Bp * Pp + Bp,              # GELU per element + rsqrt per row
        bytes_accessed=(Bp * E * x_item
                        + (E * Pp + Pp * Pp) * w_item
                        + params.size * 4
                        + Bp * Pp * o_item),
    )

    kernel = functools.partial(projection_head_kernel, eps=eps, p_valid=P,
                               approximate_gelu=approximate_gelu)

    def _call(weight_single_buffered):
        if weight_single_buffered:
            def resident(shape):
                return pl.BlockSpec(shape, lambda i: (0, 0),
                                    pipeline_mode=pl.Buffered(1))
        else:
            def resident(shape):
                return pl.BlockSpec(shape, lambda i: (0, 0))
        return pl.pallas_call(
            kernel,
            out_shape=jax.ShapeDtypeStruct((Bp, Pp), out_dtype),
            grid_spec=pltpu.PrefetchScalarGridSpec(
                num_scalar_prefetch=0,
                grid=grid,
                in_specs=[
                    pl.BlockSpec((tb, E), lambda i: (i, 0)),   # x tile (pipelined)
                    resident((E, Pp)),                         # w1 (resident, 1 buf)
                    resident((Pp, Pp)),                        # w2 (resident, 1 buf)
                    resident((4, Pp)),                         # b1/b2/gamma/beta
                ],
                out_specs=pl.BlockSpec((tb, Pp), lambda i: (i, 0)),
            ),
            compiler_params=pltpu.CompilerParams(
                dimension_semantics=("parallel",),
                vmem_limit_bytes=budget,
            ),
            cost_estimate=cost,
        )(x, w1, w2, params)

    try:
        out = _call(True)
    except Exception:
        # Fallback for jax builds that reject pipeline_mode on pallas_call specs.
        out = _call(False)

    if Bp != B or Pp != P:
        out = out[:B, :P]
    return out


def _reference(x, w1, b1, w2, b2, gamma, beta, eps=1e-5):
    projected = x @ w1 + b1.reshape(1, -1)
    h = jax.nn.gelu(projected, approximate=False)
    h = h @ w2 + b2.reshape(1, -1)
    h = h + projected
    mean = h.mean(-1, keepdims=True)
    var = ((h - mean) ** 2).mean(-1, keepdims=True)
    return (h - mean) / jnp.sqrt(var + eps) * gamma.reshape(1, -1) + beta.reshape(1, -1)


if __name__ == "__main__":
    # Small, module-consistent shapes: batch=8, embedding_dim=32, projection_dim=256
    B, E, P = 8, 32, 256

    key = jax.random.PRNGKey(0)
    kx, kw1, kb1, kw2, kb2, kx2, kw3, kb3, kw4, kb4, kx3 = jax.random.split(key, 11)

    x = jax.random.normal(kx, (B, E), dtype=jnp.float32)

    # Deterministic parameter init (PyTorch Linear-style uniform ranges).
    bound1 = 1.0 / math.sqrt(E)
    w1 = jax.random.uniform(kw1, (E, P), jnp.float32, -bound1, bound1)
    b1 = jax.random.uniform(kb1, (1, P), jnp.float32, -bound1, bound1)
    bound2 = 1.0 / math.sqrt(P)
    w2 = jax.random.uniform(kw2, (P, P), jnp.float32, -bound2, bound2)
    b2 = jax.random.uniform(kb2, (1, P), jnp.float32, -bound2, bound2)
    gamma = jnp.ones((1, P), jnp.float32)   # nn.LayerNorm default weight
    beta = jnp.zeros((1, P), jnp.float32)   # nn.LayerNorm default bias

    # 1) Exact-semantics f32 path.
    out = jax.block_until_ready(projection_head(x, w1, b1, w2, b2, gamma, beta))
    ref = _reference(x, w1, b1, w2, b2, gamma, beta)
    assert out.shape == (B, P)
    assert jnp.allclose(out, ref, atol=1e-5, rtol=1e-5), "mismatch vs reference"

    # 2) Ragged / multi-tile batch (B=300 -> 2 tiles of 152, only 4 padded rows).
    B2 = 300
    x2 = jax.random.normal(kx2, (B2, E), dtype=jnp.float32)
    out2 = jax.block_until_ready(projection_head(x2, w1, b1, w2, b2, gamma, beta))
    ref2 = _reference(x2, w1, b1, w2, b2, gamma, beta)
    assert out2.shape == (B2, P)
    assert jnp.allclose(out2, ref2, atol=1e-5, rtol=1e-5), "mismatch (ragged batch)"

    # 3) Non-multiple-of-128 projection dim: exercises lane padding + masked LN.
    P3, B3 = 200, 16
    bound3 = 1.0 / math.sqrt(E)
    w3 = jax.random.uniform(kw3, (E, P3), jnp.float32, -bound3, bound3)
    b3 = jax.random.uniform(kb3, (1, P3), jnp.float32, -bound3, bound3)
    bound4 = 1.0 / math.sqrt(P3)
    w4 = jax.random.uniform(kw4, (P3, P3), jnp.float32, -bound4, bound4)
    b4 = jax.random.uniform(kb4, (1, P3), jnp.float32, -bound4, bound4)
    g3 = jnp.ones((1, P3), jnp.float32)
    be3 = jnp.zeros((1, P3), jnp.float32)
    x3 = jax.random.normal(kx3, (B3, E), dtype=jnp.float32)
    out3 = jax.block_until_ready(projection_head(x3, w3, b3, w4, b4, g3, be3))
    ref3 = _reference(x3, w3, b3, w4, b4, g3, be3)
    assert out3.shape == (B3, P3)
    assert jnp.allclose(out3, ref3, atol=1e-5, rtol=1e-5), "mismatch (padded P)"

    # 4) bf16 MXU feed + tanh GELU (fast path) — loose tolerance vs f32 reference.
    out4 = jax.block_until_ready(
        projection_head(x, w1, b1, w2, b2, gamma, beta,
                        matmul_dtype=jnp.bfloat16, approximate_gelu=True))
    assert out4.shape == (B, P)
    assert jnp.allclose(out4, ref, atol=1e-1, rtol=1e-1), "mismatch (bf16 path)"

    print("KERNEL_OK")
</pallas_src>

<mosaic_0001>
module attributes {stable_mosaic.version = 11 : i64} {
  func.func @projection_head_kernel(%arg0: i32, %arg1: memref<8x32xf32, #tpu.memory_space<vmem>>, %arg2: memref<32x256xf32, #tpu.memory_space<vmem>>, %arg3: memref<256x256xf32, #tpu.memory_space<vmem>>, %arg4: memref<4x256xf32, #tpu.memory_space<vmem>>, %arg5: memref<8x256xf32, #tpu.memory_space<vmem>>) attributes {dimension_semantics = [#tpu.dimension_semantics<parallel>], iteration_bounds = array<i64: 1>, scalar_prefetch = 0 : i64, scratch_operands = 0 : i64, tpu.core_type = #tpu.core_type<tc>, window_params = [{transform_indices = @transform_0, window_bounds = array<i64: 8, 32>}, {pipeline_mode = #tpu.pipeline_mode<synchronous>, transform_indices = @transform_1, window_bounds = array<i64: 32, 256>}, {pipeline_mode = #tpu.pipeline_mode<synchronous>, transform_indices = @transform_2, window_bounds = array<i64: 256, 256>}, {pipeline_mode = #tpu.pipeline_mode<synchronous>, transform_indices = @transform_3, window_bounds = array<i64: 4, 256>}, {transform_indices = @transform_4, window_bounds = array<i64: 8, 256>}]} {
    %c0 = arith.constant 0 : index
    %c0_0 = arith.constant 0 : index
    %0 = vector.load %arg1[%c0, %c0_0] : memref<8x32xf32, #tpu.memory_space<vmem>>, vector<8x32xf32>
    %c0_1 = arith.constant 0 : index
    %c0_2 = arith.constant 0 : index
    %1 = vector.load %arg2[%c0_1, %c0_2] : memref<32x256xf32, #tpu.memory_space<vmem>>, vector<32x256xf32>
    %c0_3 = arith.constant 0 : index
    %c0_4 = arith.constant 0 : index
    %2 = vector.load %arg3[%c0_3, %c0_4] : memref<256x256xf32, #tpu.memory_space<vmem>>, vector<256x256xf32>
    %c0_5 = arith.constant 0 : index
    %c0_6 = arith.constant 0 : index
    %3 = vector.load %arg4[%c0_5, %c0_6] : memref<4x256xf32, #tpu.memory_space<vmem>>, vector<1x256xf32>
    %c1 = arith.constant 1 : index
    %c0_7 = arith.constant 0 : index
    %4 = vector.load %arg4[%c1, %c0_7] : memref<4x256xf32, #tpu.memory_space<vmem>>, vector<1x256xf32>
    %c2 = arith.constant 2 : index
    %c0_8 = arith.constant 0 : index
    %5 = vector.load %arg4[%c2, %c0_8] : memref<4x256xf32, #tpu.memory_space<vmem>>, vector<1x256xf32>
    %c3 = arith.constant 3 : index
    %c0_9 = arith.constant 0 : index
    %6 = vector.load %arg4[%c3, %c0_9] : memref<4x256xf32, #tpu.memory_space<vmem>>, vector<1x256xf32>
    %cst = arith.constant dense<0.000000e+00> : vector<8x256xf32>
    %7 = tpu.matmul %0, %1, %cst {dimension_numbers = #tpu.dot_dimension_numbers<[1], [0], [0], [1], [0, 0, 1, 1], [], []>} : vector<8x32xf32>, vector<32x256xf32>, vector<8x256xf32> -> vector<8x256xf32>
    %8 = vector.broadcast %3 : vector<1x256xf32> to vector<8x256xf32>
    %9 = arith.addf %7, %8 : vector<8x256xf32>
    %cst_10 = arith.constant 5.000000e-01 : f32
    %10 = vector.broadcast %cst_10 : f32 to vector<8x256xf32>
    %11 = arith.mulf %10, %9 : vector<8x256xf32>
    %cst_11 = arith.constant 0.707106769 : f32
    %12 = vector.broadcast %cst_11 : f32 to vector<8x256xf32>
    %13 = arith.mulf %9, %12 : vector<8x256xf32>
    %14 = math.erf %13 : vector<8x256xf32>
    %cst_12 = arith.constant 1.000000e+00 : f32
    %15 = vector.broadcast %cst_12 : f32 to vector<8x256xf32>
    %16 = arith.addf %15, %14 : vector<8x256xf32>
    %17 = arith.mulf %11, %16 : vector<8x256xf32>
    %cst_13 = arith.constant dense<0.000000e+00> : vector<8x256xf32>
    %18 = tpu.matmul %17, %2, %cst_13 {dimension_numbers = #tpu.dot_dimension_numbers<[1], [0], [0], [1], [0, 0, 1, 1], [], []>} : vector<8x256xf32>, vector<256x256xf32>, vector<8x256xf32> -> vector<8x256xf32>
    %19 = vector.broadcast %4 : vector<1x256xf32> to vector<8x256xf32>
    %20 = arith.addf %18, %19 : vector<8x256xf32>
    %21 = arith.addf %20, %9 : vector<8x256xf32>
    %cst_14 = arith.constant dense<0.000000e+00> : vector<8xf32>
    %22 = vector.multi_reduction <add>, %21, %cst_14 [1] : vector<8x256xf32> to vector<8xf32>
    %23 = vector.shape_cast %22 : vector<8xf32> to vector<8x1xf32>
    %cst_15 = arith.constant 2.560000e+02 : f32
    %24 = vector.broadcast %cst_15 : f32 to vector<8x1xf32>
    %25 = arith.divf %23, %24 : vector<8x1xf32>
    %26 = vector.broadcast %25 : vector<8x1xf32> to vector<8x256xf32>
    %27 = arith.subf %21, %26 : vector<8x256xf32>
    %28 = arith.mulf %27, %27 : vector<8x256xf32>
    %cst_16 = arith.constant dense<0.000000e+00> : vector<8xf32>
    %29 = vector.multi_reduction <add>, %28, %cst_16 [1] : vector<8x256xf32> to vector<8xf32>
    %30 = vector.shape_cast %29 : vector<8xf32> to vector<8x1xf32>
    %cst_17 = arith.constant 2.560000e+02 : f32
    %31 = vector.broadcast %cst_17 : f32 to vector<8x1xf32>
    %32 = arith.divf %30, %31 : vector<8x1xf32>
    %cst_18 = arith.constant 9.99999974E-6 : f32
    %33 = vector.broadcast %cst_18 : f32 to vector<8x1xf32>
    %34 = arith.addf %32, %33 : vector<8x1xf32>
    %35 = math.rsqrt %34 : vector<8x1xf32>
    %36 = vector.broadcast %35 : vector<8x1xf32> to vector<8x256xf32>
    %37 = arith.mulf %27, %36 : vector<8x256xf32>
    %38 = vector.broadcast %5 : vector<1x256xf32> to vector<8x256xf32>
    %39 = arith.mulf %37, %38 : vector<8x256xf32>
    %40 = vector.broadcast %6 : vector<1x256xf32> to vector<8x256xf32>
    %41 = arith.addf %39, %40 : vector<8x256xf32>
    %c0_19 = arith.constant 0 : index
    %c0_20 = arith.constant 0 : index
    %42 = vector.load %arg5[%c0_19, %c0_20] : memref<8x256xf32, #tpu.memory_space<vmem>>, vector<8x256xf32>
    tpu.vector_store %arg5[%c0_19, %c0_20], %41 {strides = array<i32>} : memref<8x256xf32, #tpu.memory_space<vmem>>, vector<8x256xf32>,
    return
  }
  func.func @transform_0(%arg0: i32) -> (i32, i32) {
    %c0_i32 = arith.constant 0 : i32
    %c0_i32_0 = arith.constant 0 : i32
    return %arg0, %c0_i32 : i32, i32
  }
  func.func @transform_1(%arg0: i32) -> (i32, i32) {
    %c0_i32 = arith.constant 0 : i32
    %c0_i32_0 = arith.constant 0 : i32
    %c0_i32_1 = arith.constant 0 : i32
    return %c0_i32, %c0_i32_0 : i32, i32
  }
  func.func @transform_2(%arg0: i32) -> (i32, i32) {
    %c0_i32 = arith.constant 0 : i32
    %c0_i32_0 = arith.constant 0 : i32
    %c0_i32_1 = arith.constant 0 : i32
    return %c0_i32, %c0_i32_0 : i32, i32
  }
  func.func @transform_3(%arg0: i32) -> (i32, i32) {
    %c0_i32 = arith.constant 0 : i32
    %c0_i32_0 = arith.constant 0 : i32
    %c0_i32_1 = arith.constant 0 : i32
    return %c0_i32, %c0_i32_0 : i32, i32
  }
  func.func @transform_4(%arg0: i32) -> (i32, i32) {
    %c0_i32 = arith.constant 0 : i32
    %c0_i32_0 = arith.constant 0 : i32
    return %arg0, %c0_i32 : i32, i32
  }
}

module attributes {stable_mosaic.version = 11 : i64} {
  func.func @projection_head_kernel(%arg0: i32, %arg1: memref<8x32xf32, #tpu.memory_space<vmem>>, %arg2: memref<32x256xf32, #tpu.memory_space<vmem>>, %arg3: memref<256x256xf32, #tpu.memory_space<vmem>>, %arg4: memref<4x256xf32, #tpu.memory_space<vmem>>, %arg5: memref<8x256xf32, #tpu.memory_space<vmem>>) attributes {dimension_semantics = [#tpu.dimension_semantics<parallel>], iteration_bounds = array<i64: 1>, scalar_prefetch = 0 : i64, scratch_operands = 0 : i64, tpu.core_type = #tpu.core_type<tc>, window_params = [{transform_indices = @transform_0, window_bounds = array<i64: 8, 32>}, {pipeline_mode = #tpu.pipeline_mode<synchronous>, transform_indices = @transform_1, window_bounds = array<i64: 32, 256>}, {pipeline_mode = #tpu.pipeline_mode<synchronous>, transform_indices = @transform_2, window_bounds = array<i64: 256, 256>}, {pipeline_mode = #tpu.pipeline_mode<synchronous>, transform_indices = @transform_3, window_bounds = array<i64: 4, 256>}, {transform_indices = @transform_4, window_bounds = array<i64: 8, 256>}]} {
    %c0 = arith.constant 0 : index
    %c0_0 = arith.constant 0 : index
    %0 = vector.load %arg1[%c0, %c0_0] : memref<8x32xf32, #tpu.memory_space<vmem>>, vector<8x32xf32>
    %c0_1 = arith.constant 0 : index
    %c0_2 = arith.constant 0 : index
    %1 = vector.load %arg2[%c0_1, %c0_2] : memref<32x256xf32, #tpu.memory_space<vmem>>, vector<32x256xf32>
    %c0_3 = arith.constant 0 : index
    %c0_4 = arith.constant 0 : index
    %2 = vector.load %arg3[%c0_3, %c0_4] : memref<256x256xf32, #tpu.memory_space<vmem>>, vector<256x256xf32>
    %c0_5 = arith.constant 0 : index
    %c0_6 = arith.constant 0 : index
    %3 = vector.load %arg4[%c0_5, %c0_6] : memref<4x256xf32, #tpu.memory_space<vmem>>, vector<1x256xf32>
    %c1 = arith.constant 1 : index
    %c0_7 = arith.constant 0 : index
    %4 = vector.load %arg4[%c1, %c0_7] : memref<4x256xf32, #tpu.memory_space<vmem>>, vector<1x256xf32>
    %c2 = arith.constant 2 : index
    %c0_8 = arith.constant 0 : index
    %5 = vector.load %arg4[%c2, %c0_8] : memref<4x256xf32, #tpu.memory_space<vmem>>, vector<1x256xf32>
    %c3 = arith.constant 3 : index
    %c0_9 = arith.constant 0 : index
    %6 = vector.load %arg4[%c3, %c0_9] : memref<4x256xf32, #tpu.memory_space<vmem>>, vector<1x256xf32>
    %cst = arith.constant dense<0.000000e+00> : vector<8x256xf32>
    %7 = tpu.matmul %0, %1, %cst {dimension_numbers = #tpu.dot_dimension_numbers<[1], [0], [0], [1], [0, 0, 1, 1], [], []>} : vector<8x32xf32>, vector<32x256xf32>, vector<8x256xf32> -> vector<8x256xf32>
    %8 = vector.broadcast %3 : vector<1x256xf32> to vector<8x256xf32>
    %9 = arith.addf %7, %8 : vector<8x256xf32>
    %cst_10 = arith.constant 5.000000e-01 : f32
    %10 = vector.broadcast %cst_10 : f32 to vector<8x256xf32>
    %11 = arith.mulf %10, %9 : vector<8x256xf32>
    %cst_11 = arith.constant 0.707106769 : f32
    %12 = vector.broadcast %cst_11 : f32 to vector<8x256xf32>
    %13 = arith.mulf %9, %12 : vector<8x256xf32>
    %14 = math.erf %13 : vector<8x256xf32>
    %cst_12 = arith.constant 1.000000e+00 : f32
    %15 = vector.broadcast %cst_12 : f32 to vector<8x256xf32>
    %16 = arith.addf %15, %14 : vector<8x256xf32>
    %17 = arith.mulf %11, %16 : vector<8x256xf32>
    %cst_13 = arith.constant dense<0.000000e+00> : vector<8x256xf32>
    %18 = tpu.matmul %17, %2, %cst_13 {dimension_numbers = #tpu.dot_dimension_numbers<[1], [0], [0], [1], [0, 0, 1, 1], [], []>} : vector<8x256xf32>, vector<256x256xf32>, vector<8x256xf32> -> vector<8x256xf32>
    %19 = vector.broadcast %4 : vector<1x256xf32> to vector<8x256xf32>
    %20 = arith.addf %18, %19 : vector<8x256xf32>
    %21 = arith.addf %20, %9 : vector<8x256xf32>
    %cst_14 = arith.constant dense<0.000000e+00> : vector<8xf32>
    %22 = vector.multi_reduction <add>, %21, %cst_14 [1] : vector<8x256xf32> to vector<8xf32>
    %23 = vector.shape_cast %22 : vector<8xf32> to vector<8x1xf32>
    %cst_15 = arith.constant 2.560000e+02 : f32
    %24 = vector.broadcast %cst_15 : f32 to vector<8x1xf32>
    %25 = arith.divf %23, %24 : vector<8x1xf32>
    %26 = vector.broadcast %25 : vector<8x1xf32> to vector<8x256xf32>
    %27 = arith.subf %21, %26 : vector<8x256xf32>
    %28 = arith.mulf %27, %27 : vector<8x256xf32>
    %cst_16 = arith.constant dense<0.000000e+00> : vector<8xf32>
    %29 = vector.multi_reduction <add>, %28, %cst_16 [1] : vector<8x256xf32> to vector<8xf32>
    %30 = vector.shape_cast %29 : vector<8xf32> to vector<8x1xf32>
    %cst_17 = arith.constant 2.560000e+02 : f32
    %31 = vector.broadcast %cst_17 : f32 to vector<8x1xf32>
    %32 = arith.divf %30, %31 : vector<8x1xf32>
    %cst_18 = arith.constant 9.99999974E-6 : f32
    %33 = vector.broadcast %cst_18 : f32 to vector<8x1xf32>
    %34 = arith.addf %32, %33 : vector<8x1xf32>
    %35 = math.rsqrt %34 : vector<8x1xf32>
    %36 = vector.broadcast %35 : vector<8x1xf32> to vector<8x256xf32>
    %37 = arith.mulf %27, %36 : vector<8x256xf32>
    %38 = vector.broadcast %5 : vector<1x256xf32> to vector<8x256xf32>
    %39 = arith.mulf %37, %38 : vector<8x256xf32>
    %40 = vector.broadcast %6 : vector<1x256xf32> to vector<8x256xf32>
    %41 = arith.addf %39, %40 : vector<8x256xf32>
    %c0_19 = arith.constant 0 : index
    %c0_20 = arith.constant 0 : index
    %42 = vector.load %arg5[%c0_19, %c0_20] : memref<8x256xf32, #tpu.memory_space<vmem>>, vector<8x256xf32>
    tpu.vector_store %arg5[%c0_19, %c0_20], %41 {strides = array<i32>} : memref<8x256xf32, #tpu.memory_space<vmem>>, vector<8x256xf32>,
    return
  }
  func.func @transform_0(%arg0: i32) -> (i32, i32) {
    %c0_i32 = arith.constant 0 : i32
    %c0_i32_0 = arith.constant 0 : i32
    return %arg0, %c0_i32 : i32, i32
  }
  func.func @transform_1(%arg0: i32) -> (i32, i32) {
    %c0_i32 = arith.constant 0 : i32
    %c0_i32_0 = arith.constant 0 : i32
    %c0_i32_1 = arith.constant 0 : i32
    return %c0_i32, %c0_i32_0 : i32, i32
  }
  func.func @transform_2(%arg0: i32) -> (i32, i32) {
    %c0_i32 = arith.constant 0 : i32
    %c0_i32_0 = arith.constant 0 : i32
    %c0_i32_1 = arith.constant 0 : i32
    return %c0_i32, %c0_i32_0 : i32, i32
  }
  func.func @transform_3(%arg0: i32) -> (i32, i32) {
    %c0_i32 = arith.constant 0 : i32
    %c0_i32_0 = arith.constant 0 : i32
    %c0_i32_1 = arith.constant 0 : i32
    return %c0_i32, %c0_i32_0 : i32, i32
  }
  func.func @transform_4(%arg0: i32) -> (i32, i32) {
    %c0_i32 = arith.constant 0 : i32
    %c0_i32_0 = arith.constant 0 : i32
    return %arg0, %c0_i32 : i32, i32
  }
}

</mosaic_0001>

<llo_original>
// kernel: tpu_custom_call.1
$region0: #{tpu_custom_call.1}
  #allocation0 [shape = 'u32[]', space=smem, size = 0x4, offset = 0x4, fixed_abs, tag = 'smem constant byte address 0x4 - core index']
  #allocation1 [shape = 'u32[144,128]{1,0:T(1,128)}', space=vmem, size = 0x12000, scoped, tag = 'internal scratch']
  %s0 = inlined_call_operand.hbm [shape: f32[8,32], index: 0, kind: input, shape index: {}]
  %s1 = inlined_call_operand.hbm [shape: f32[32,256], index: 1, kind: input, shape index: {}]
  %s2 = inlined_call_operand.hbm [shape: f32[256,256], index: 2, kind: input, shape index: {}]
  %s3 = inlined_call_operand.hbm [shape: f32[4,256], index: 3, kind: input, shape index: {}]
  %s4 = inlined_call_operand.hbm [shape: f32[8,256], index: 4, kind: output, shape index: {}]
  %s5 = sld [smem:[#allocation0]]
  $region42: #{tpu_custom_call.1} parent=0
    _
  %s7 = ssub.s32 1, %s5
  %s8 = scalar_select 0, %s7, %s5
  $region1: #{tpu_custom_call.1} parent=0
    #allocation2 [shape = 'u8[4096]{0}', space=vmem, size = 0x1000, scoped, tag = 'input window, operand 0, single buffered']
    #allocation3 [shape = 's32[1]{0}', space=sflag, size = 0x4, scoped, tag = 'scoped memory for tpu_custom_call.1']
    #allocation4 [shape = 's32[1]{0}', space=sflag, size = 0x4, scoped, tag = 'scoped memory for tpu_custom_call.1']
    #allocation5 [shape = 'u8[32768]{0}', space=vmem, size = 0x8000, scoped, tag = 'input window, operand 1, single buffered']
    #allocation6 [shape = 's32[1]{0}', space=sflag, size = 0x4, scoped, tag = 'scoped memory for tpu_custom_call.1']
    #allocation7 [shape = 'u8[262144]{0}', space=vmem, size = 0x40000, scoped, tag = 'input window, operand 2, single buffered']
    #allocation8 [shape = 'u8[4096]{0}', space=vmem, size = 0x1000, scoped, tag = 'input window, operand 3, single buffered']
    #allocation9 [shape = 's32[1]{0}', space=sflag, size = 0x4, scoped, tag = 'scoped memory for tpu_custom_call.1']
    #allocation10 [shape = 'u8[8192]{0}', space=vmem, size = 0x2000, scoped, tag = 'output window, operand 0, single buffered']
    %9 = vsyncpa [#allocation3], 0
    %10 = vsyncpa [#allocation6], 0
    %11 = vsyncpa [#allocation9], 0
    %12 = vsyncpa [#allocation4], 0
    // Predicated region
    $region2: #{tpu_custom_call.1} parent=1 // pred_check
      _
    $region3: #{tpu_custom_call.1} parent=1 // pred_check_branch
      %14 = sbr.rel (0) target = $region5
    $region4: #{tpu_custom_call.1} parent=1 // pred_region
      %s16 = ssub.s32 128, 128
      %17 = vsyncadd [#allocation3], %s16
      %s19 = sshll.u32 [#allocation2], 4
      %s20 = int_to_ptr.vmem [resolvable:$true] %s19
      %22 = dma.hbm_to_vmem [thread:$0]  %s0, 128, %s20, [#allocation3]
    $region5: #{tpu_custom_call.1} parent=1 // pred_fallthru
      _
    // Predicated region
    $region6: #{tpu_custom_call.1} parent=1 // pred_check
      _
    $region7: #{tpu_custom_call.1} parent=1 // pred_check_branch
      %24 = sbr.rel (0) target = $region9
    $region8: #{tpu_custom_call.1} parent=1 // pred_region
      %s26 = ssub.s32 1024, 1024
      %27 = vsyncadd [#allocation6], %s26
      %s28 = sshll.u32 [#allocation5], 4
      %s29 = int_to_ptr.vmem [resolvable:$true] %s28
      %34 = dma.hbm_to_vmem [thread:$0]  %s1, 1024, %s29, [#allocation6], 256, 256, 16
    $region9: #{tpu_custom_call.1} parent=1 // pred_fallthru
      _
    // Predicated region
    $region10: #{tpu_custom_call.1} parent=1 // pred_check
      _
    $region11: #{tpu_custom_call.1} parent=1 // pred_check_branch
      %36 = sbr.rel (0) target = $region13
    $region12: #{tpu_custom_call.1} parent=1 // pred_region
      %s38 = ssub.s32 8192, 8192
      %39 = vsyncadd [#allocation6], %s38
      %s40 = sshll.u32 [#allocation7], 4
      %s41 = int_to_ptr.vmem [resolvable:$true] %s40
      %46 = dma.hbm_to_vmem [thread:$0]  %s2, 8192, %s41, [#allocation6], 256, 256, 16
    $region13: #{tpu_custom_call.1} parent=1 // pred_fallthru
      _
    // Predicated region
    $region14: #{tpu_custom_call.1} parent=1 // pred_check
      _
    $region15: #{tpu_custom_call.1} parent=1 // pred_check_branch
      %48 = sbr.rel (0) target = $region17
    $region16: #{tpu_custom_call.1} parent=1 // pred_region
      %s50 = ssub.s32 128, 128
      %51 = vsyncadd [#allocation9], %s50
      %s53 = sshll.u32 [#allocation8], 4
      %s54 = int_to_ptr.vmem [resolvable:$true] %s53
      %56 = dma.hbm_to_vmem [thread:$0]  %s3, 128, %s54, [#allocation9]
    $region17: #{tpu_custom_call.1} parent=1 // pred_fallthru
      _
    // Predicated region
    $region18: #{tpu_custom_call.1} parent=1 // pred_check
      _
    $region19: #{tpu_custom_call.1} parent=1 // pred_check_branch
      %58 = sbr.rel (0) target = $region21
    $region20: #{tpu_custom_call.1} parent=1 // pred_region
      %59 = dma.done [#allocation3], 128
    $region21: #{tpu_custom_call.1} parent=1 // pred_fallthru
      _
    // Predicated region
    $region22: #{tpu_custom_call.1} parent=1 // pred_check
      _
    $region23: #{tpu_custom_call.1} parent=1 // pred_check_branch
      %61 = sbr.rel (0) target = $region25
    $region24: #{tpu_custom_call.1} parent=1 // pred_region
      %62 = dma.done [#allocation6], 1024
    $region25: #{tpu_custom_call.1} parent=1 // pred_fallthru
      _
    // Predicated region
    $region26: #{tpu_custom_call.1} parent=1 // pred_check
      _
    $region27: #{tpu_custom_call.1} parent=1 // pred_check_branch
      %64 = sbr.rel (0) target = $region29
    $region28: #{tpu_custom_call.1} parent=1 // pred_region
      %65 = dma.done [#allocation6], 8192
    $region29: #{tpu_custom_call.1} parent=1 // pred_fallthru
      _
    // Predicated region
    $region30: #{tpu_custom_call.1} parent=1 // pred_check
      _
    $region31: #{tpu_custom_call.1} parent=1 // pred_check_branch
      %67 = sbr.rel (0) target = $region33
    $region32: #{tpu_custom_call.1} parent=1 // pred_region
      %68 = dma.done [#allocation9], 128
    $region33: #{tpu_custom_call.1} parent=1 // pred_fallthru
      _
    %v69 = vld [vmem:[#allocation2] sm:$0xff]
    %v70 = vld [vmem:[#allocation5] sm:$0xff]
    %v71 = vld [vmem:[#allocation5 + $0x8] sm:$0xff]
    %v72 = vld [vmem:[#allocation5 + $0x10] sm:$0xff]
    %v73 = vld [vmem:[#allocation5 + $0x18] sm:$0xff]
    %v74 = vld [vmem:[#allocation5 + $0x20] sm:$0xff]
    %v75 = vld [vmem:[#allocation5 + $0x28] sm:$0xff]
    %v76 = vld [vmem:[#allocation5 + $0x30] sm:$0xff]
    %v77 = vld [vmem:[#allocation5 + $0x38] sm:$0xff]
    %v78 = vld [vmem:[#allocation7] sm:$0xff]
    %v79 = vld [vmem:[#allocation7 + $0x8] sm:$0xff]
    %v80 = vld [vmem:[#allocation7 + $0x10] sm:$0xff]
    %v81 = vld [vmem:[#allocation7 + $0x18] sm:$0xff]
    %v82 = vld [vmem:[#allocation7 + $0x20] sm:$0xff]
    %v83 = vld [vmem:[#allocation7 + $0x28] sm:$0xff]
    %v84 = vld [vmem:[#allocation7 + $0x30] sm:$0xff]
    %v85 = vld [vmem:[#allocation7 + $0x38] sm:$0xff]
    %v86 = vld [vmem:[#allocation7 + $0x40] sm:$0xff]
    %v87 = vld [vmem:[#allocation7 + $0x48] sm:$0xff]
    %v88 = vld [vmem:[#allocation7 + $0x50] sm:$0xff]
    %v89 = vld [vmem:[#allocation7 + $0x58] sm:$0xff]
    %v90 = vld [vmem:[#allocation7 + $0x60] sm:$0xff]
    %v91 = vld [vmem:[#allocation7 + $0x68] sm:$0xff]
    %v92 = vld [vmem:[#allocation7 + $0x70] sm:$0xff]
    %v93 = vld [vmem:[#allocation7 + $0x78] sm:$0xff]
    %v94 = vld [vmem:[#allocation7 + $0x80] sm:$0xff]
    %v95 = vld [vmem:[#allocation7 + $0x88] sm:$0xff]
    %v96 = vld [vmem:[#allocation7 + $0x90] sm:$0xff]
    %v97 = vld [vmem:[#allocation7 + $0x98] sm:$0xff]
    %v98 = vld [vmem:[#allocation7 + $0xa0] sm:$0xff]
    %v99 = vld [vmem:[#allocation7 + $0xa8] sm:$0xff]
    %v100 = vld [vmem:[#allocation7 + $0xb0] sm:$0xff]
    %v101 = vld [vmem:[#allocation7 + $0xb8] sm:$0xff]
    %v102 = vld [vmem:[#allocation7 + $0xc0] sm:$0xff]
    %v103 = vld [vmem:[#allocation7 + $0xc8] sm:$0xff]
    %v104 = vld [vmem:[#allocation7 + $0xd0] sm:$0xff]
    %v105 = vld [vmem:[#allocation7 + $0xd8] sm:$0xff]
    %v106 = vld [vmem:[#allocation7 + $0xe0] sm:$0xff]
    %v107 = vld [vmem:[#allocation7 + $0xe8] sm:$0xff]
    %v108 = vld [vmem:[#allocation7 + $0xf0] sm:$0xff]
    %v109 = vld [vmem:[#allocation7 + $0xf8] sm:$0xff]
    %v110 = vld [vmem:[#allocation7 + $0x100] sm:$0xff]
    %v111 = vld [vmem:[#allocation7 + $0x108] sm:$0xff]
    %v112 = vld [vmem:[#allocation7 + $0x110] sm:$0xff]
    %v113 = vld [vmem:[#allocation7 + $0x118] sm:$0xff]
    %v114 = vld [vmem:[#allocation7 + $0x120] sm:$0xff]
    %v115 = vld [vmem:[#allocation7 + $0x128] sm:$0xff]
    %v116 = vld [vmem:[#allocation7 + $0x130] sm:$0xff]
    %v117 = vld [vmem:[#allocation7 + $0x138] sm:$0xff]
    %v118 = vld [vmem:[#allocation7 + $0x140] sm:$0xff]
    %v119 = vld [vmem:[#allocation7 + $0x148] sm:$0xff]
    %v120 = vld [vmem:[#allocation7 + $0x150] sm:$0xff]
    %v121 = vld [vmem:[#allocation7 + $0x158] sm:$0xff]
    %v122 = vld [vmem:[#allocation7 + $0x160] sm:$0xff]
    %v123 = vld [vmem:[#allocation7 + $0x168] sm:$0xff]
    %v124 = vld [vmem:[#allocation7 + $0x170] sm:$0xff]
    %v125 = vld [vmem:[#allocation7 + $0x178] sm:$0xff]
    %v126 = vld [vmem:[#allocation7 + $0x180] sm:$0xff]
    %v127 = vld [vmem:[#allocation7 + $0x188] sm:$0xff]
    %v128 = vld [vmem:[#allocation7 + $0x190] sm:$0xff]
    %v129 = vld [vmem:[#allocation7 + $0x198] sm:$0xff]
    %v130 = vld [vmem:[#allocation7 + $0x1a0] sm:$0xff]
    %v131 = vld [vmem:[#allocation7 + $0x1a8] sm:$0xff]
    %v132 = vld [vmem:[#allocation7 + $0x1b0] sm:$0xff]
    %v133 = vld [vmem:[#allocation7 + $0x1b8] sm:$0xff]
    %v134 = vld [vmem:[#allocation7 + $0x1c0] sm:$0xff]
    %v135 = vld [vmem:[#allocation7 + $0x1c8] sm:$0xff]
    %v136 = vld [vmem:[#allocation7 + $0x1d0] sm:$0xff]
    %v137 = vld [vmem:[#allocation7 + $0x1d8] sm:$0xff]
    %v138 = vld [vmem:[#allocation7 + $0x1e0] sm:$0xff]
    %v139 = vld [vmem:[#allocation7 + $0x1e8] sm:$0xff]
    %v140 = vld [vmem:[#allocation7 + $0x1f0] sm:$0xff]
    %v141 = vld [vmem:[#allocation7 + $0x1f8] sm:$0xff]
    %v142 = vld [vmem:[#allocation8] ss:$4 sm:$0x3]
    %s143 = scalar_lea.vmem [#allocation8], 1
    %v144 = vld [vmem:[%s143] ss:$4 sm:$0x3]
    %s145 = scalar_lea.vmem [#allocation8], 2
    %v146 = vld [vmem:[%s145] ss:$4 sm:$0x3]
    %s147 = scalar_lea.vmem [#allocation8], 3
    %v148 = vld [vmem:[%s147] ss:$4 sm:$0x3]
    %v150 = vlaneseq
    %v151 = vshrl.u32 %v150, 7
    %v152 = vsub.s32 0, %v151
    %v153 = vrot.slane %v142, %v152
    %v154 = vlaneseq
    %v155 = vshrl.u32 %v154, 7
    %v156 = vsub.s32 1, %v155
    %v157 = vrot.slane %v142, %v156
    %vm160 = vcmask 261120
    %v162 = vsel %vm160, %v69, 0
    %164 = vmatprep.subr.mxu0 0.0
    %165 = vmatpush1.msra.mxu0 0.0
    %166 = vmatprep.subr.mxu0 0.0
    %167 = vmatpush1.msra.mxu0 0.0
    %168 = vmatprep.subr.mxu0 0.0
    %169 = vmatpush1.msra.mxu0 0.0
    %170 = vmatprep.subr.mxu0 0.0
    %171 = vmatpush1.msra.mxu0 0.0
    %172 = vmatprep.subr.mxu0 0.0
    %173 = vmatpush1.msra.mxu0 0.0
    %174 = vmatprep.subr.mxu0 0.0
    %175 = vmatpush1.msra.mxu0 0.0
    %176 = vmatprep.subr.mxu0 0.0
    %177 = vmatpush1.msra.mxu0 0.0
    %178 = vmatprep.subr.mxu0 0.0
    %179 = vmatpush1.msra.mxu0 0.0
    %180 = vmatprep.subr.mxu0 0.0
    %181 = vmatpush1.msra.mxu0 0.0
    %182 = vmatprep.subr.mxu0 0.0
    %183 = vmatpush1.msra.mxu0 0.0
    %184 = vmatprep.subr.mxu0 0.0
    %185 = vmatpush1.msra.mxu0 0.0
    %186 = vmatprep.subr.mxu0 0.0
    %187 = vmatpush1.msra.mxu0 0.0
    %188 = vmatprep.subr.mxu0 %v77
    %189 = vmatpush1.msra.mxu0 %v76
    %190 = vmatprep.subr.mxu0 %v75
    %191 = vmatpush1.msra.mxu0 %v74
    %192 = vmatprep.subr.mxu0 %v73
    %193 = vmatpush1.msra.mxu0 %v72
    %194 = vmatprep.subr.mxu0 %v71
    %195 = vmatpush1.msra.mxu0 %v70
    %196 = vmatprep.subr.mxu0 0.0
    %197 = vmatpush2.msra.mxu0 0.0
    %198 = vmatprep.subr.mxu0 0.0
    %199 = vmatpush2.msra.mxu0 0.0
    %200 = vmatprep.subr.mxu0 0.0
    %201 = vmatpush2.msra.mxu0 0.0
    %202 = vmatprep.subr.mxu0 0.0
    %203 = vmatpush2.msra.mxu0 0.0
    %204 = vmatprep.subr.mxu0 0.0
    %205 = vmatpush2.msra.mxu0 0.0
    %206 = vmatprep.subr.mxu0 0.0
    %207 = vmatpush2.msra.mxu0 0.0
    %208 = vmatprep.subr.mxu0 0.0
    %209 = vmatpush2.msra.mxu0 0.0
    %210 = vmatprep.subr.mxu0 0.0
    %211 = vmatpush2.msra.mxu0 0.0
    %212 = vmatprep.subr.mxu0 0.0
    %213 = vmatpush2.msra.mxu0 0.0
    %214 = vmatprep.subr.mxu0 0.0
    %215 = vmatpush2.msra.mxu0 0.0
    %216 = vmatprep.subr.mxu0 0.0
    %217 = vmatpush2.msra.mxu0 0.0
    %218 = vmatprep.subr.mxu0 0.0
    %219 = vmatpush2.msra.mxu0 0.0
    %220 = vmatprep.subr.mxu0 0.0
    %221 = vmatpush2.msra.mxu0 0.0
    %222 = vmatprep.subr.mxu0 0.0
    %223 = vmatpush2.msra.mxu0 0.0
    %224 = vmatprep.subr.mxu0 0.0
    %225 = vmatpush2.msra.mxu0 0.0
    %226 = vmatprep.subr.mxu0 0.0
    %227 = vmatpush2.msra.mxu0 0.0
    %228 = vmatprep.mubr.f32.mxu0 0.0
    %229 = vmatmul.mubr.f32.gmra.mxu0 %v162
    %v230 = vpop.f32.mrf.mxu0
    %v231 = vadd.f32 %v153, %v230
    %v232 = vpop.f32.mrf.mxu0
    %v233 = vadd.f32 %v157, %v232
    %234 = vdwg.mxu0
    %v235 = vmul.f32 %v231, 0.5
    %v236 = vmul.f32 %v233, 0.5
    %v237 = vmul.f32 %v231, 0.70710677
    %v238 = vmul.f32 %v233, 0.70710677
    %v239 = verf.f32.pop %v237
    %v240 = verf.f32.pop %v238
    %v241 = vadd.f32 %v239, 1.0
    %v242 = vadd.f32 %v240, 1.0
    %v243 = vmul.f32 %v235, %v241
    %v244 = vmul.f32 %v236, %v242
    %v246 = vlaneseq
    %v247 = vshrl.u32 %v246, 7
    %v248 = vsub.s32 0, %v247
    %v249 = vrot.slane %v144, %v248
    %v250 = vlaneseq
    %v251 = vshrl.u32 %v250, 7
    %v252 = vsub.s32 1, %v251
    %v253 = vrot.slane %v144, %v252
    %256 = vmatprep.subr.mxu0 %v109
    %257 = vmatpush1.msra.mxu0 %v108
    %258 = vmatprep.subr.mxu0 %v107
    %259 = vmatpush1.msra.mxu0 %v106
    %260 = vmatprep.subr.mxu0 %v105
    %261 = vmatpush1.msra.mxu0 %v104
    %262 = vmatprep.subr.mxu0 %v103
    %263 = vmatpush1.msra.mxu0 %v102
    %264 = vmatprep.subr.mxu0 %v101
    %265 = vmatpush1.msra.mxu0 %v100
    %266 = vmatprep.subr.mxu0 %v99
    %267 = vmatpush1.msra.mxu0 %v98
    %268 = vmatprep.subr.mxu0 %v97
    %269 = vmatpush1.msra.mxu0 %v96
    %270 = vmatprep.subr.mxu0 %v95
    %271 = vmatpush1.msra.mxu0 %v94
    %272 = vmatprep.subr.mxu0 %v93
    %273 = vmatpush1.msra.mxu0 %v92
    %274 = vmatprep.subr.mxu0 %v91
    %275 = vmatpush1.msra.mxu0 %v90
    %276 = vmatprep.subr.mxu0 %v89
    %277 = vmatpush1.msra.mxu0 %v88
    %278 = vmatprep.subr.mxu0 %v87
    %279 = vmatpush1.msra.mxu0 %v86
    %280 = vmatprep.subr.mxu0 %v85
    %281 = vmatpush1.msra.mxu0 %v84
    %282 = vmatprep.subr.mxu0 %v83
    %283 = vmatpush1.msra.mxu0 %v82
    %284 = vmatprep.subr.mxu0 %v81
    %285 = vmatpush1.msra.mxu0 %v80
    %286 = vmatprep.subr.mxu0 %v79
    %287 = vmatpush1.msra.mxu0 %v78
    %288 = vmatprep.subr.mxu0 %v141
    %289 = vmatpush2.msra.mxu0 %v140
    %290 = vmatprep.subr.mxu0 %v139
    %291 = vmatpush2.msra.mxu0 %v138
    %292 = vmatprep.subr.mxu0 %v137
    %293 = vmatpush2.msra.mxu0 %v136
    %294 = vmatprep.subr.mxu0 %v135
    %295 = vmatpush2.msra.mxu0 %v134
    %296 = vmatprep.subr.mxu0 %v133
    %297 = vmatpush2.msra.mxu0 %v132
    %298 = vmatprep.subr.mxu0 %v131
    %299 = vmatpush2.msra.mxu0 %v130
    %300 = vmatprep.subr.mxu0 %v129
    %301 = vmatpush2.msra.mxu0 %v128
    %302 = vmatprep.subr.mxu0 %v127
    %303 = vmatpush2.msra.mxu0 %v126
    %304 = vmatprep.subr.mxu0 %v125
    %305 = vmatpush2.msra.mxu0 %v124
    %306 = vmatprep.subr.mxu0 %v123
    %307 = vmatpush2.msra.mxu0 %v122
    %308 = vmatprep.subr.mxu0 %v121
    %309 = vmatpush2.msra.mxu0 %v120
    %310 = vmatprep.subr.mxu0 %v119
    %311 = vmatpush2.msra.mxu0 %v118
    %312 = vmatprep.subr.mxu0 %v117
    %313 = vmatpush2.msra.mxu0 %v116
    %314 = vmatprep.subr.mxu0 %v115
    %315 = vmatpush2.msra.mxu0 %v114
    %316 = vmatprep.subr.mxu0 %v113
    %317 = vmatpush2.msra.mxu0 %v112
    %318 = vmatprep.subr.mxu0 %v111
    %319 = vmatpush2.msra.mxu0 %v110
    %320 = vmatprep.mubr.f32.mxu0 %v244
    %321 = vmatmul.mubr.f32.gmra.mxu0 %v243
    %v322 = vpop.f32.mrf.mxu0
    %v323 = vadd.f32 %v249, %v322
    %v324 = vpop.f32.mrf.mxu0
    %v325 = vadd.f32 %v253, %v324
    %326 = vdwg.mxu0
    %v327 = vadd.f32 %v323, %v231
    %v328 = vadd.f32 %v325, %v233
    %v329 = vadd.f32 %v327, %v328
    %330 = vadd.xlane.f32.xlu0 %v329
    %v331 = vpop.xlane.xlu0 %330
    %v332 = vrcp.pop 256.0
    %v333 = vmul.f32 %v331, %v332
    %v334 = vsub.f32 %v327, %v333
    %v335 = vsub.f32 %v328, %v333
    %v336 = vmul.f32 %v334, %v334
    %v337 = vmul.f32 %v335, %v335
    %v338 = vadd.f32 %v336, %v337
    %339 = vadd.xlane.f32.xlu0 %v338
    %v340 = vpop.xlane.xlu0 %339
    %v341 = vmul.f32 %v340, %v332
    %v342 = vadd.f32 %v341, 1e-05
    %v343 = vrsqrt.pop %v342
    %v344 = vmul.f32 %v334, %v343
    %v345 = vmul.f32 %v335, %v343
    %v347 = vlaneseq
    %v348 = vshrl.u32 %v347, 7
    %v349 = vsub.s32 0, %v348
    %v350 = vrot.slane %v146, %v349
    %v351 = vlaneseq
    %v352 = vshrl.u32 %v351, 7
    %v353 = vsub.s32 1, %v352
    %v354 = vrot.slane %v146, %v353
    %v357 = vmul.f32 %v344, %v350
    %v358 = vmul.f32 %v345, %v354
    %v360 = vlaneseq
    %v361 = vshrl.u32 %v360, 7
    %v362 = vsub.s32 0, %v361
    %v363 = vrot.slane %v148, %v362
    %v364 = vlaneseq
    %v365 = vshrl.u32 %v364, 7
    %v366 = vsub.s32 1, %v365
    %v367 = vrot.slane %v148, %v366
    %v370 = vadd.f32 %v357, %v363
    %v371 = vadd.f32 %v358, %v367
    %372 = vst [vmem:[#allocation10] sm:$0xff] %v370
    %373 = vst [vmem:[#allocation10 + $0x8] sm:$0xff] %v371
    // Predicated region
    $region34: #{tpu_custom_call.1} parent=1 // pred_check
      _
    $region35: #{tpu_custom_call.1} parent=1 // pred_check_branch
      %375 = sbr.rel (0) target = $region37
    $region36: #{tpu_custom_call.1} parent=1 // pred_region
      %s377 = ssub.s32 256, 256
      %378 = vsyncadd [#allocation4], %s377
      %s380 = sshll.u32 [#allocation10], 4
      %s381 = int_to_ptr.vmem [resolvable:$true] %s380
      %383 = dma.vmem_to_hbm [thread:$0]  %s381, 256, %s4, [#allocation4]
    $region37: #{tpu_custom_call.1} parent=1 // pred_fallthru
      _
    // Predicated region
    $region38: #{tpu_custom_call.1} parent=1 // pred_check
      _
    $region39: #{tpu_custom_call.1} parent=1 // pred_check_branch
      %385 = sbr.rel (0) target = $region41
    $region40: #{tpu_custom_call.1} parent=1 // pred_region
      %386 = dma.done [#allocation4], 256
    $region41: #{tpu_custom_call.1} parent=1 // pred_fallthru
      _
    %387 = vsyncpa [#allocation3], 1
    %388 = vsyncpa [#allocation6], 1
    %389 = vsyncpa [#allocation9], 1
    %390 = vsyncpa [#allocation4], 1

// kernel: tpu_custom_call.1
$region0: #{tpu_custom_call.1}
  #allocation0 [shape = 'u32[]', space=smem, size = 0x4, offset = 0x4, fixed_abs, tag = 'smem constant byte address 0x4 - core index']
  #allocation1 [shape = 'u32[144,128]{1,0:T(1,128)}', space=vmem, size = 0x12000, scoped, tag = 'internal scratch']
  %s0 = inlined_call_operand.hbm [shape: f32[8,32], index: 0, kind: input, shape index: {}]
  %s1 = inlined_call_operand.hbm [shape: f32[32,256], index: 1, kind: input, shape index: {}]
  %s2 = inlined_call_operand.hbm [shape: f32[256,256], index: 2, kind: input, shape index: {}]
  %s3 = inlined_call_operand.hbm [shape: f32[4,256], index: 3, kind: input, shape index: {}]
  %s4 = inlined_call_operand.hbm [shape: f32[8,256], index: 4, kind: output, shape index: {}]
  %s5 = sld [smem:[#allocation0]]
  $region42: #{tpu_custom_call.1} parent=0
    _
  %s7 = ssub.s32 1, %s5
  %s8 = scalar_select 0, %s7, %s5
  $region1: #{tpu_custom_call.1} parent=0
    #allocation2 [shape = 'u8[4096]{0}', space=vmem, size = 0x1000, scoped, tag = 'input window, operand 0, single buffered']
    #allocation3 [shape = 's32[1]{0}', space=sflag, size = 0x4, scoped, tag = 'scoped memory for tpu_custom_call.1']
    #allocation4 [shape = 's32[1]{0}', space=sflag, size = 0x4, scoped, tag = 'scoped memory for tpu_custom_call.1']
    #allocation5 [shape = 'u8[32768]{0}', space=vmem, size = 0x8000, scoped, tag = 'input window, operand 1, single buffered']
    #allocation6 [shape = 's32[1]{0}', space=sflag, size = 0x4, scoped, tag = 'scoped memory for tpu_custom_call.1']
    #allocation7 [shape = 'u8[262144]{0}', space=vmem, size = 0x40000, scoped, tag = 'input window, operand 2, single buffered']
    #allocation8 [shape = 'u8[4096]{0}', space=vmem, size = 0x1000, scoped, tag = 'input window, operand 3, single buffered']
    #allocation9 [shape = 's32[1]{0}', space=sflag, size = 0x4, scoped, tag = 'scoped memory for tpu_custom_call.1']
    #allocation10 [shape = 'u8[8192]{0}', space=vmem, size = 0x2000, scoped, tag = 'output window, operand 0, single buffered']
    %9 = vsyncpa [#allocation3], 0
    %10 = vsyncpa [#allocation6], 0
    %11 = vsyncpa [#allocation9], 0
    %12 = vsyncpa [#allocation4], 0
    // Predicated region
    $region2: #{tpu_custom_call.1} parent=1 // pred_check
      _
    $region3: #{tpu_custom_call.1} parent=1 // pred_check_branch
      %14 = sbr.rel (0) target = $region5
    $region4: #{tpu_custom_call.1} parent=1 // pred_region
      %s16 = ssub.s32 128, 128
      %17 = vsyncadd [#allocation3], %s16
      %s19 = sshll.u32 [#allocation2], 4
      %s20 = int_to_ptr.vmem [resolvable:$true] %s19
      %22 = dma.hbm_to_vmem [thread:$0]  %s0, 128, %s20, [#allocation3]
    $region5: #{tpu_custom_call.1} parent=1 // pred_fallthru
      _
    // Predicated region
    $region6: #{tpu_custom_call.1} parent=1 // pred_check
      _
    $region7: #{tpu_custom_call.1} parent=1 // pred_check_branch
      %24 = sbr.rel (0) target = $region9
    $region8: #{tpu_custom_call.1} parent=1 // pred_region
      %s26 = ssub.s32 1024, 1024
      %27 = vsyncadd [#allocation6], %s26
      %s28 = sshll.u32 [#allocation5], 4
      %s29 = int_to_ptr.vmem [resolvable:$true] %s28
      %34 = dma.hbm_to_vmem [thread:$0]  %s1, 1024, %s29, [#allocation6], 256, 256, 16
    $region9: #{tpu_custom_call.1} parent=1 // pred_fallthru
      _
    // Predicated region
    $region10: #{tpu_custom_call.1} parent=1 // pred_check
      _
    $region11: #{tpu_custom_call.1} parent=1 // pred_check_branch
      %36 = sbr.rel (0) target = $region13
    $region12: #{tpu_custom_call.1} parent=1 // pred_region
      %s38 = ssub.s32 8192, 8192
      %39 = vsyncadd [#allocation6], %s38
      %s40 = sshll.u32 [#allocation7], 4
      %s41 = int_to_ptr.vmem [resolvable:$true] %s40
      %46 = dma.hbm_to_vmem [thread:$0]  %s2, 8192, %s41, [#allocation6], 256, 256, 16
    $region13: #{tpu_custom_call.1} parent=1 // pred_fallthru
      _
    // Predicated region
    $region14: #{tpu_custom_call.1} parent=1 // pred_check
      _
    $region15: #{tpu_custom_call.1} parent=1 // pred_check_branch
      %48 = sbr.rel (0) target = $region17
    $region16: #{tpu_custom_call.1} parent=1 // pred_region
      %s50 = ssub.s32 128, 128
      %51 = vsyncadd [#allocation9], %s50
      %s53 = sshll.u32 [#allocation8], 4
      %s54 = int_to_ptr.vmem [resolvable:$true] %s53
      %56 = dma.hbm_to_vmem [thread:$0]  %s3, 128, %s54, [#allocation9]
    $region17: #{tpu_custom_call.1} parent=1 // pred_fallthru
      _
    // Predicated region
    $region18: #{tpu_custom_call.1} parent=1 // pred_check
      _
    $region19: #{tpu_custom_call.1} parent=1 // pred_check_branch
      %58 = sbr.rel (0) target = $region21
    $region20: #{tpu_custom_call.1} parent=1 // pred_region
      %59 = dma.done [#allocation3], 128
    $region21: #{tpu_custom_call.1} parent=1 // pred_fallthru
      _
    // Predicated region
    $region22: #{tpu_custom_call.1} parent=1 // pred_check
      _
    $region23: #{tpu_custom_call.1} parent=1 // pred_check_branch
      %61 = sbr.rel (0) target = $region25
    $region24: #{tpu_custom_call.1} parent=1 // pred_region
      %62 = dma.done [#allocation6], 1024
    $region25: #{tpu_custom_call.1} parent=1 // pred_fallthru
      _
    // Predicated region
    $region26: #{tpu_custom_call.1} parent=1 // pred_check
      _
    $region27: #{tpu_custom_call.1} parent=1 // pred_check_branch
      %64 = sbr.rel (0) target = $region29
    $region28: #{tpu_custom_call.1} parent=1 // pred_region
      %65 = dma.done [#allocation6], 8192
    $region29: #{tpu_custom_call.1} parent=1 // pred_fallthru
      _
    // Predicated region
    $region30: #{tpu_custom_call.1} parent=1 // pred_check
      _
    $region31: #{tpu_custom_call.1} parent=1 // pred_check_branch
      %67 = sbr.rel (0) target = $region33
    $region32: #{tpu_custom_call.1} parent=1 // pred_region
      %68 = dma.done [#allocation9], 128
    $region33: #{tpu_custom_call.1} parent=1 // pred_fallthru
      _
    %v69 = vld [vmem:[#allocation2] sm:$0xff]
    %v70 = vld [vmem:[#allocation5] sm:$0xff]
    %v71 = vld [vmem:[#allocation5 + $0x8] sm:$0xff]
    %v72 = vld [vmem:[#allocation5 + $0x10] sm:$0xff]
    %v73 = vld [vmem:[#allocation5 + $0x18] sm:$0xff]
    %v74 = vld [vmem:[#allocation5 + $0x20] sm:$0xff]
    %v75 = vld [vmem:[#allocation5 + $0x28] sm:$0xff]
    %v76 = vld [vmem:[#allocation5 + $0x30] sm:$0xff]
    %v77 = vld [vmem:[#allocation5 + $0x38] sm:$0xff]
    %v78 = vld [vmem:[#allocation7] sm:$0xff]
    %v79 = vld [vmem:[#allocation7 + $0x8] sm:$0xff]
    %v80 = vld [vmem:[#allocation7 + $0x10] sm:$0xff]
    %v81 = vld [vmem:[#allocation7 + $0x18] sm:$0xff]
    %v82 = vld [vmem:[#allocation7 + $0x20] sm:$0xff]
    %v83 = vld [vmem:[#allocation7 + $0x28] sm:$0xff]
    %v84 = vld [vmem:[#allocation7 + $0x30] sm:$0xff]
    %v85 = vld [vmem:[#allocation7 + $0x38] sm:$0xff]
    %v86 = vld [vmem:[#allocation7 + $0x40] sm:$0xff]
    %v87 = vld [vmem:[#allocation7 + $0x48] sm:$0xff]
    %v88 = vld [vmem:[#allocation7 + $0x50] sm:$0xff]
    %v89 = vld [vmem:[#allocation7 + $0x58] sm:$0xff]
    %v90 = vld [vmem:[#allocation7 + $0x60] sm:$0xff]
    %v91 = vld [vmem:[#allocation7 + $0x68] sm:$0xff]
    %v92 = vld [vmem:[#allocation7 + $0x70] sm:$0xff]
    %v93 = vld [vmem:[#allocation7 + $0x78] sm:$0xff]
    %v94 = vld [vmem:[#allocation7 + $0x80] sm:$0xff]
    %v95 = vld [vmem:[#allocation7 + $0x88] sm:$0xff]
    %v96 = vld [vmem:[#allocation7 + $0x90] sm:$0xff]
    %v97 = vld [vmem:[#allocation7 + $0x98] sm:$0xff]
    %v98 = vld [vmem:[#allocation7 + $0xa0] sm:$0xff]
    %v99 = vld [vmem:[#allocation7 + $0xa8] sm:$0xff]
    %v100 = vld [vmem:[#allocation7 + $0xb0] sm:$0xff]
    %v101 = vld [vmem:[#allocation7 + $0xb8] sm:$0xff]
    %v102 = vld [vmem:[#allocation7 + $0xc0] sm:$0xff]
    %v103 = vld [vmem:[#allocation7 + $0xc8] sm:$0xff]
    %v104 = vld [vmem:[#allocation7 + $0xd0] sm:$0xff]
    %v105 = vld [vmem:[#allocation7 + $0xd8] sm:$0xff]
    %v106 = vld [vmem:[#allocation7 + $0xe0] sm:$0xff]
    %v107 = vld [vmem:[#allocation7 + $0xe8] sm:$0xff]
    %v108 = vld [vmem:[#allocation7 + $0xf0] sm:$0xff]
    %v109 = vld [vmem:[#allocation7 + $0xf8] sm:$0xff]
    %v110 = vld [vmem:[#allocation7 + $0x100] sm:$0xff]
    %v111 = vld [vmem:[#allocation7 + $0x108] sm:$0xff]
    %v112 = vld [vmem:[#allocation7 + $0x110] sm:$0xff]
    %v113 = vld [vmem:[#allocation7 + $0x118] sm:$0xff]
    %v114 = vld [vmem:[#allocation7 + $0x120] sm:$0xff]
    %v115 = vld [vmem:[#allocation7 + $0x128] sm:$0xff]
    %v116 = vld [vmem:[#allocation7 + $0x130] sm:$0xff]
    %v117 = vld [vmem:[#allocation7 + $0x138] sm:$0xff]
    %v118 = vld [vmem:[#allocation7 + $0x140] sm:$0xff]
    %v119 = vld [vmem:[#allocation7 + $0x148] sm:$0xff]
    %v120 = vld [vmem:[#allocation7 + $0x150] sm:$0xff]
    %v121 = vld [vmem:[#allocation7 + $0x158] sm:$0xff]
    %v122 = vld [vmem:[#allocation7 + $0x160] sm:$0xff]
    %v123 = vld [vmem:[#allocation7 + $0x168] sm:$0xff]
    %v124 = vld [vmem:[#allocation7 + $0x170] sm:$0xff]
    %v125 = vld [vmem:[#allocation7 + $0x178] sm:$0xff]
    %v126 = vld [vmem:[#allocation7 + $0x180] sm:$0xff]
    %v127 = vld [vmem:[#allocation7 + $0x188] sm:$0xff]
    %v128 = vld [vmem:[#allocation7 + $0x190] sm:$0xff]
    %v129 = vld [vmem:[#allocation7 + $0x198] sm:$0xff]
    %v130 = vld [vmem:[#allocation7 + $0x1a0] sm:$0xff]
    %v131 = vld [vmem:[#allocation7 + $0x1a8] sm:$0xff]
    %v132 = vld [vmem:[#allocation7 + $0x1b0] sm:$0xff]
    %v133 = vld [vmem:[#allocation7 + $0x1b8] sm:$0xff]
    %v134 = vld [vmem:[#allocation7 + $0x1c0] sm:$0xff]
    %v135 = vld [vmem:[#allocation7 + $0x1c8] sm:$0xff]
    %v136 = vld [vmem:[#allocation7 + $0x1d0] sm:$0xff]
    %v137 = vld [vmem:[#allocation7 + $0x1d8] sm:$0xff]
    %v138 = vld [vmem:[#allocation7 + $0x1e0] sm:$0xff]
    %v139 = vld [vmem:[#allocation7 + $0x1e8] sm:$0xff]
    %v140 = vld [vmem:[#allocation7 + $0x1f0] sm:$0xff]
    %v141 = vld [vmem:[#allocation7 + $0x1f8] sm:$0xff]
    %v142 = vld [vmem:[#allocation8] ss:$4 sm:$0x3]
    %s143 = scalar_lea.vmem [#allocation8], 1
    %v144 = vld [vmem:[%s143] ss:$4 sm:$0x3]
    %s145 = scalar_lea.vmem [#allocation8], 2
    %v146 = vld [vmem:[%s145] ss:$4 sm:$0x3]
    %s147 = scalar_lea.vmem [#allocation8], 3
    %v148 = vld [vmem:[%s147] ss:$4 sm:$0x3]
    %v150 = vlaneseq
    %v151 = vshrl.u32 %v150, 7
    %v152 = vsub.s32 0, %v151
    %v153 = vrot.slane %v142, %v152
    %v154 = vlaneseq
    %v155 = vshrl.u32 %v154, 7
    %v156 = vsub.s32 1, %v155
    %v157 = vrot.slane %v142, %v156
    %vm160 = vcmask 261120
    %v162 = vsel %vm160, %v69, 0
    %164 = vmatprep.subr.mxu0 0.0
    %165 = vmatpush1.msra.mxu0 0.0
    %166 = vmatprep.subr.mxu0 0.0
    %167 = vmatpush1.msra.mxu0 0.0
    %168 = vmatprep.subr.mxu0 0.0
    %169 = vmatpush1.msra.mxu0 0.0
    %170 = vmatprep.subr.mxu0 0.0
    %171 = vmatpush1.msra.mxu0 0.0
    %172 = vmatprep.subr.mxu0 0.0
    %173 = vmatpush1.msra.mxu0 0.0
    %174 = vmatprep.subr.mxu0 0.0
    %175 = vmatpush1.msra.mxu0 0.0
    %176 = vmatprep.subr.mxu0 0.0
    %177 = vmatpush1.msra.mxu0 0.0
    %178 = vmatprep.subr.mxu0 0.0
    %179 = vmatpush1.msra.mxu0 0.0
    %180 = vmatprep.subr.mxu0 0.0
    %181 = vmatpush1.msra.mxu0 0.0
    %182 = vmatprep.subr.mxu0 0.0
    %183 = vmatpush1.msra.mxu0 0.0
    %184 = vmatprep.subr.mxu0 0.0
    %185 = vmatpush1.msra.mxu0 0.0
    %186 = vmatprep.subr.mxu0 0.0
    %187 = vmatpush1.msra.mxu0 0.0
    %188 = vmatprep.subr.mxu0 %v77
    %189 = vmatpush1.msra.mxu0 %v76
    %190 = vmatprep.subr.mxu0 %v75
    %191 = vmatpush1.msra.mxu0 %v74
    %192 = vmatprep.subr.mxu0 %v73
    %193 = vmatpush1.msra.mxu0 %v72
    %194 = vmatprep.subr.mxu0 %v71
    %195 = vmatpush1.msra.mxu0 %v70
    %196 = vmatprep.subr.mxu0 0.0
    %197 = vmatpush2.msra.mxu0 0.0
    %198 = vmatprep.subr.mxu0 0.0
    %199 = vmatpush2.msra.mxu0 0.0
    %200 = vmatprep.subr.mxu0 0.0
    %201 = vmatpush2.msra.mxu0 0.0
    %202 = vmatprep.subr.mxu0 0.0
    %203 = vmatpush2.msra.mxu0 0.0
    %204 = vmatprep.subr.mxu0 0.0
    %205 = vmatpush2.msra.mxu0 0.0
    %206 = vmatprep.subr.mxu0 0.0
    %207 = vmatpush2.msra.mxu0 0.0
    %208 = vmatprep.subr.mxu0 0.0
    %209 = vmatpush2.msra.mxu0 0.0
    %210 = vmatprep.subr.mxu0 0.0
    %211 = vmatpush2.msra.mxu0 0.0
    %212 = vmatprep.subr.mxu0 0.0
    %213 = vmatpush2.msra.mxu0 0.0
    %214 = vmatprep.subr.mxu0 0.0
    %215 = vmatpush2.msra.mxu0 0.0
    %216 = vmatprep.subr.mxu0 0.0
    %217 = vmatpush2.msra.mxu0 0.0
    %218 = vmatprep.subr.mxu0 0.0
    %219 = vmatpush2.msra.mxu0 0.0
    %220 = vmatprep.subr.mxu0 0.0
    %221 = vmatpush2.msra.mxu0 0.0
    %222 = vmatprep.subr.mxu0 0.0
    %223 = vmatpush2.msra.mxu0 0.0
    %224 = vmatprep.subr.mxu0 0.0
    %225 = vmatpush2.msra.mxu0 0.0
    %226 = vmatprep.subr.mxu0 0.0
    %227 = vmatpush2.msra.mxu0 0.0
    %228 = vmatprep.mubr.f32.mxu0 0.0
    %229 = vmatmul.mubr.f32.gmra.mxu0 %v162
    %v230 = vpop.f32.mrf.mxu0
    %v231 = vadd.f32 %v153, %v230
    %v232 = vpop.f32.mrf.mxu0
    %v233 = vadd.f32 %v157, %v232
    %234 = vdwg.mxu0
    %v235 = vmul.f32 %v231, 0.5
    %v236 = vmul.f32 %v233, 0.5
    %v237 = vmul.f32 %v231, 0.70710677
    %v238 = vmul.f32 %v233, 0.70710677
    %v239 = verf.f32.pop %v237
    %v240 = verf.f32.pop %v238
    %v241 = vadd.f32 %v239, 1.0
    %v242 = vadd.f32 %v240, 1.0
    %v243 = vmul.f32 %v235, %v241
    %v244 = vmul.f32 %v236, %v242
    %v246 = vlaneseq
    %v247 = vshrl.u32 %v246, 7
    %v248 = vsub.s32 0, %v247
    %v249 = vrot.slane %v144, %v248
    %v250 = vlaneseq
    %v251 = vshrl.u32 %v250, 7
    %v252 = vsub.s32 1, %v251
    %v253 = vrot.slane %v144, %v252
    %256 = vmatprep.subr.mxu0 %v109
    %257 = vmatpush1.msra.mxu0 %v108
    %258 = vmatprep.subr.mxu0 %v107
    %259 = vmatpush1.msra.mxu0 %v106
    %260 = vmatprep.subr.mxu0 %v105
    %261 = vmatpush1.msra.mxu0 %v104
    %262 = vmatprep.subr.mxu0 %v103
    %263 = vmatpush1.msra.mxu0 %v102
    %264 = vmatprep.subr.mxu0 %v101
    %265 = vmatpush1.msra.mxu0 %v100
    %266 = vmatprep.subr.mxu0 %v99
    %267 = vmatpush1.msra.mxu0 %v98
    %268 = vmatprep.subr.mxu0 %v97
    %269 = vmatpush1.msra.mxu0 %v96
    %270 = vmatprep.subr.mxu0 %v95
    %271 = vmatpush1.msra.mxu0 %v94
    %272 = vmatprep.subr.mxu0 %v93
    %273 = vmatpush1.msra.mxu0 %v92
    %274 = vmatprep.subr.mxu0 %v91
    %275 = vmatpush1.msra.mxu0 %v90
    %276 = vmatprep.subr.mxu0 %v89
    %277 = vmatpush1.msra.mxu0 %v88
    %278 = vmatprep.subr.mxu0 %v87
    %279 = vmatpush1.msra.mxu0 %v86
    %280 = vmatprep.subr.mxu0 %v85
    %281 = vmatpush1.msra.mxu0 %v84
    %282 = vmatprep.subr.mxu0 %v83
    %283 = vmatpush1.msra.mxu0 %v82
    %284 = vmatprep.subr.mxu0 %v81
    %285 = vmatpush1.msra.mxu0 %v80
    %286 = vmatprep.subr.mxu0 %v79
    %287 = vmatpush1.msra.mxu0 %v78
    %288 = vmatprep.subr.mxu0 %v141
    %289 = vmatpush2.msra.mxu0 %v140
    %290 = vmatprep.subr.mxu0 %v139
    %291 = vmatpush2.msra.mxu0 %v138
    %292 = vmatprep.subr.mxu0 %v137
    %293 = vmatpush2.msra.mxu0 %v136
    %294 = vmatprep.subr.mxu0 %v135
    %295 = vmatpush2.msra.mxu0 %v134
    %296 = vmatprep.subr.mxu0 %v133
    %297 = vmatpush2.msra.mxu0 %v132
    %298 = vmatprep.subr.mxu0 %v131
    %299 = vmatpush2.msra.mxu0 %v130
    %300 = vmatprep.subr.mxu0 %v129
    %301 = vmatpush2.msra.mxu0 %v128
    %302 = vmatprep.subr.mxu0 %v127
    %303 = vmatpush2.msra.mxu0 %v126
    %304 = vmatprep.subr.mxu0 %v125
    %305 = vmatpush2.msra.mxu0 %v124
    %306 = vmatprep.subr.mxu0 %v123
    %307 = vmatpush2.msra.mxu0 %v122
    %308 = vmatprep.subr.mxu0 %v121
    %309 = vmatpush2.msra.mxu0 %v120
    %310 = vmatprep.subr.mxu0 %v119
    %311 = vmatpush2.msra.mxu0 %v118
    %312 = vmatprep.subr.mxu0 %v117
    %313 = vmatpush2.msra.mxu0 %v116
    %314 = vmatprep.subr.mxu0 %v115
    %315 = vmatpush2.msra.mxu0 %v114
    %316 = vmatprep.subr.mxu0 %v113
    %317 = vmatpush2.msra.mxu0 %v112
    %318 = vmatprep.subr.mxu0 %v111
    %319 = vmatpush2.msra.mxu0 %v110
    %320 = vmatprep.mubr.f32.mxu0 %v244
    %321 = vmatmul.mubr.f32.gmra.mxu0 %v243
    %v322 = vpop.f32.mrf.mxu0
    %v323 = vadd.f32 %v249, %v322
    %v324 = vpop.f32.mrf.mxu0
    %v325 = vadd.f32 %v253, %v324
    %326 = vdwg.mxu0
    %v327 = vadd.f32 %v323, %v231
    %v328 = vadd.f32 %v325, %v233
    %v329 = vadd.f32 %v327, %v328
    %330 = vadd.xlane.f32.xlu0 %v329
    %v331 = vpop.xlane.xlu0 %330
    %v332 = vrcp.pop 256.0
    %v333 = vmul.f32 %v331, %v332
    %v334 = vsub.f32 %v327, %v333
    %v335 = vsub.f32 %v328, %v333
    %v336 = vmul.f32 %v334, %v334
    %v337 = vmul.f32 %v335, %v335
    %v338 = vadd.f32 %v336, %v337
    %339 = vadd.xlane.f32.xlu0 %v338
    %v340 = vpop.xlane.xlu0 %339
    %v341 = vmul.f32 %v340, %v332
    %v342 = vadd.f32 %v341, 1e-05
    %v343 = vrsqrt.pop %v342
    %v344 = vmul.f32 %v334, %v343
    %v345 = vmul.f32 %v335, %v343
    %v347 = vlaneseq
    %v348 = vshrl.u32 %v347, 7
    %v349 = vsub.s32 0, %v348
    %v350 = vrot.slane %v146, %v349
    %v351 = vlaneseq
    %v352 = vshrl.u32 %v351, 7
    %v353 = vsub.s32 1, %v352
    %v354 = vrot.slane %v146, %v353
    %v357 = vmul.f32 %v344, %v350
    %v358 = vmul.f32 %v345, %v354
    %v360 = vlaneseq
    %v361 = vshrl.u32 %v360, 7
    %v362 = vsub.s32 0, %v361
    %v363 = vrot.slane %v148, %v362
    %v364 = vlaneseq
    %v365 = vshrl.u32 %v364, 7
    %v366 = vsub.s32 1, %v365
    %v367 = vrot.slane %v148, %v366
    %v370 = vadd.f32 %v357, %v363
    %v371 = vadd.f32 %v358, %v367
    %372 = vst [vmem:[#allocation10] sm:$0xff] %v370
    %373 = vst [vmem:[#allocation10 + $0x8] sm:$0xff] %v371
    // Predicated region
    $region34: #{tpu_custom_call.1} parent=1 // pred_check
      _
    $region35: #{tpu_custom_call.1} parent=1 // pred_check_branch
      %375 = sbr.rel (0) target = $region37
    $region36: #{tpu_custom_call.1} parent=1 // pred_region
      %s377 = ssub.s32 256, 256
      %378 = vsyncadd [#allocation4], %s377
      %s380 = sshll.u32 [#allocation10], 4
      %s381 = int_to_ptr.vmem [resolvable:$true] %s380
      %383 = dma.vmem_to_hbm [thread:$0]  %s381, 256, %s4, [#allocation4]
    $region37: #{tpu_custom_call.1} parent=1 // pred_fallthru
      _
    // Predicated region
    $region38: #{tpu_custom_call.1} parent=1 // pred_check
      _
    $region39: #{tpu_custom_call.1} parent=1 // pred_check_branch
      %385 = sbr.rel (0) target = $region41
    $region40: #{tpu_custom_call.1} parent=1 // pred_region
      %386 = dma.done [#allocation4], 256
    $region41: #{tpu_custom_call.1} parent=1 // pred_fallthru
      _
    %387 = vsyncpa [#allocation3], 1
    %388 = vsyncpa [#allocation6], 1
    %389 = vsyncpa [#allocation9], 1
    %390 = vsyncpa [#allocation4], 1

</llo_original>
